<compile_context>
chip_gen: v5e
topology: v5e:2x2
jax: 0.10.0
libtpu: 0.0.40
codegen_flags: <defaults>
</compile_context>

<pallas_src>
import functools

import jax
import jax.numpy as jnp
from jax.experimental import pallas as pl
from jax.experimental.pallas import tpu as pltpu

ALPHA = 0.2          # LeakyReLU negative slope
H1, H2 = 256, 64     # hidden widths of the MLP


def _round_up(x, m):
    return ((x + m - 1) // m) * m


def _leaky_relu(x, alpha):
    return jnp.where(x > 0, x, alpha * x)


def _disc_central_kernel(x_ref, w1_ref, b1_ref, w2_ref, b2_ref, w3_ref, b3_ref,
                         out_ref, *, alpha):
    # x arrives straight from HBM as f32; cast to the MXU compute dtype here (VPU,
    # hides under the x DMA / layer-1 matmul) instead of a wrapper-side pass over x.
    x = x_ref[...].astype(w1_ref.dtype)

    # ---- Layer 1: Linear(D -> 256) + LeakyReLU (f32 accumulation) ----
    h1 = jnp.dot(x, w1_ref[...], preferred_element_type=jnp.float32)
    h1 = _leaky_relu(h1 + b1_ref[...], alpha)          # b1 (1,256) broadcasts
    # TODO(synk): training-mode nn.Dropout(0.3) (Bernoulli mask + 1/(1-p) scale) is
    # not reproduced; eval-mode identity is used.

    # ---- Layer 2: Linear(256 -> 64) + LeakyReLU ----
    h2 = jnp.dot(h1.astype(w2_ref.dtype), w2_ref[...],
                 preferred_element_type=jnp.float32)
    h2 = _leaky_relu(h2 + b2_ref[...], alpha)          # (TB, 64), f32

    # ---- Layer 3: Linear(64 -> 1) + Sigmoid, produced lane-dense ----
    # w3 is stored as (8, 64) in the compute dtype with the real weights in row 0
    # (rows 1..7 zero).  (8,64) x (TB,64)^T -> (8, TB); take row 0 -> (1, TB) logits.
    logits = jax.lax.dot_general(
        w3_ref[...], h2.astype(w3_ref.dtype), (((1,), (1,)), ((), ())),
        preferred_element_type=jnp.float32)
    logits = logits[0:1, :] + b3_ref[0, 0]             # scalar bias from SMEM
    out_ref[...] = jax.nn.sigmoid(logits).astype(out_ref.dtype)


def _chip_profile():
    """Best-effort TPU-generation detection for tile-size / VMEM defaults."""
    kind = ""
    vmem_bytes = 128 << 20
    try:
        kind = (getattr(jax.devices()[0], "device_kind", "") or "").lower()
    except Exception:
        pass
    try:
        vmem_bytes = int(getattr(pltpu.get_tpu_info(), "vmem_capacity_bytes",
                                 vmem_bytes))
    except Exception:
        pass
    if ("v7" in kind) or (vmem_bytes <= (64 << 20)):
        # v7x: 2 TensorCores/chip, 64 MiB physical VMEM (32 MiB scoped default).
        return dict(num_cores=2, max_tb=512, vmem_limit=48 << 20)
    # v5e / v6e: single TensorCore, 128 MiB VMEM -> bigger tiles are free.
    return dict(num_cores=1, max_tb=1024, vmem_limit=100 << 20)


def _vmem_estimate(tb, d, cdt_bytes):
    """Conservative per-call VMEM estimate (count every operand double-buffered)."""
    x_db = 2 * tb * d * 4                        # streamed x tile (f32), 2 buffers
    w1 = 2 * d * H1 * cdt_bytes                  # resident weights (counted 2x)
    w2 = 2 * H1 * H2 * cdt_bytes
    w3 = 2 * 8 * H2 * cdt_bytes
    biases = 2 * (H1 + H2) * 4
    out = 2 * tb * 4
    inter = (tb * d * cdt_bytes
             + tb * H1 * (4 + cdt_bytes)
             + tb * H2 * (4 + cdt_bytes))
    return x_db + w1 + w2 + w3 + biases + out + inter


def _pick_batch_tile(B, D, cdt_bytes, prof, max_batch_tile):
    max_tb = max_batch_tile if max_batch_tile is not None else prof["max_tb"]
    budget = int(0.75 * prof["vmem_limit"])
    # Small batches: one tile, 16-row aligned (bf16 packs 16 rows per sublane group).
    single_tile_cap = max_tb if prof["num_cores"] == 1 else min(max_tb, 256)
    if B <= single_tile_cap:
        return _round_up(B, 16)
    # Multi-tile: lane-dense (multiple-of-128) tiles.  On v7x make sure we produce at
    # least num_cores tiles so the "parallel" grid axis shards across TensorCores.
    tb = min(max_tb, _round_up(pl.cdiv(B, prof["num_cores"]), 128))
    tb = max(tb, 128)
    # VMEM guard (v7x 64 MiB physical / scoped limits).
    # TODO(synk): for very large D a K-tiled grid axis over D with an f32 accumulator
    # would be needed instead of holding the whole x row / w1 resident.
    while tb > 128 and _vmem_estimate(tb, D, cdt_bytes) > budget:
        tb = max(128, _round_up(tb // 2, 128))
    # Prefer a tile that divides B exactly: skips the batch-pad copy of x entirely.
    for cand in range(tb, 127, -128):
        if B % cand == 0:
            return cand
    return tb


def discriminator_central(x, params, *, alpha=ALPHA,
                          compute_dtype=jnp.bfloat16, max_batch_tile=None):
    """Run the central discriminator MLP as one batch-tiled Pallas call.

    x: [B, D] float32, D = n_samples * n_groups
    params: dict with w1 [D,256], b1 [1,256], w2 [256,64], b2 [1,64],
            w3 [64,1], b3 [1,1]
    returns: [B, 1] float32 in (0, 1)
    """
    w1, b1 = params["w1"], params["b1"]
    w2, b2 = params["w2"], params["b2"]
    w3, b3 = params["w3"], params["b3"]
    B, D = x.shape
    cdt = jnp.dtype(compute_dtype)
    prof = _chip_profile()

    TB = _pick_batch_tile(B, D, cdt.itemsize, prof, max_batch_tile)
    B_pad = _round_up(B, TB)
    num_tiles = B_pad // TB

    # x stays f32 and un-padded on the feature dim (kernel casts per tile).  Batch
    # rows are zero-padded only when B is not a multiple of TB (uncommon by design).
    xk = x if B_pad == B else jnp.pad(x, ((0, B_pad - B), (0, 0)))

    # Small resident operands (one-time, negligible traffic).
    w1c = w1.astype(cdt)                                               # (D, 256)
    w2c = w2.astype(cdt)                                               # (256, 64)
    b1r = b1.reshape(1, H1).astype(jnp.float32)
    b2r = b2.reshape(1, H2).astype(jnp.float32)
    # w3 as an (8, 64) sublane-aligned block, real weights in row 0, compute dtype.
    w3p = jnp.pad(w3.reshape(H2, 1).T, ((0, 7), (0, 0))).astype(cdt)   # (8, 64)
    b3s = jnp.asarray(b3, jnp.float32).reshape(1, 1)                   # SMEM scalar

    cost = pl.CostEstimate(
        flops=2 * B * (D * H1 + H1 * H2 + H2),
        transcendentals=B,
        bytes_accessed=int(B * D * x.dtype.itemsize
                           + (w1c.size + w2c.size + w3p.size) * cdt.itemsize
                           + (b1r.size + b2r.size + 1) * 4
                           + B_pad * 4))

    kernel = functools.partial(_disc_central_kernel, alpha=alpha)
    out = pl.pallas_call(
        kernel,
        grid=(num_tiles,),
        in_specs=[
            pl.BlockSpec((TB, D), lambda i: (i, 0)),            # x tile (streamed f32)
            pl.BlockSpec((D, H1), lambda i: (0, 0)),            # w1 (VMEM-resident)
            pl.BlockSpec((1, H1), lambda i: (0, 0)),            # b1 (resident)
            pl.BlockSpec((H1, H2), lambda i: (0, 0)),           # w2 (resident)
            pl.BlockSpec((1, H2), lambda i: (0, 0)),            # b2 (resident)
            pl.BlockSpec((8, H2), lambda i: (0, 0)),            # w3 rows (resident)
            pl.BlockSpec(memory_space=pltpu.MemorySpace.SMEM),  # b3 scalar
        ],
        out_specs=pl.BlockSpec((1, TB), lambda i: (0, i)),      # lane-dense output
        out_shape=jax.ShapeDtypeStruct((1, B_pad), jnp.float32),
        compiler_params=pltpu.CompilerParams(
            dimension_semantics=("parallel",),
            vmem_limit_bytes=prof["vmem_limit"]),
        cost_estimate=cost,
    )(xk, w1c, b1r, w2c, b2r, w3p, b3s)

    # Drop batch padding and restore the [B, 1] PyTorch output shape.
    return out[0, :B].reshape(B, 1)


def init_params(key, d_in, h1=H1, h2=H2, d_out=1):
    """Mimics PyTorch nn.Linear default init (U[-1/sqrt(fan_in), 1/sqrt(fan_in)])."""
    ks = jax.random.split(key, 6)

    def lin(kw, kb, fan_in, fan_out):
        bound = 1.0 / jnp.sqrt(fan_in)
        w = jax.random.uniform(kw, (fan_in, fan_out), jnp.float32, -bound, bound)
        b = jax.random.uniform(kb, (1, fan_out), jnp.float32, -bound, bound)
        return w, b

    w1, b1 = lin(ks[0], ks[1], d_in, h1)
    w2, b2 = lin(ks[2], ks[3], h1, h2)
    w3, b3 = lin(ks[4], ks[5], h2, d_out)
    return {"w1": w1, "b1": b1, "w2": w2, "b2": b2, "w3": w3, "b3": b3}


def reference_forward(x, params, alpha=ALPHA):
    h = x @ params["w1"] + params["b1"]
    h = jnp.where(h > 0, h, alpha * h)
    h = h @ params["w2"] + params["b2"]
    h = jnp.where(h > 0, h, alpha * h)
    h = h @ params["w3"] + params["b3"]
    return jax.nn.sigmoid(h)


if __name__ == "__main__":
    # Small, forward-consistent shapes: n_samples=8, n_groups=4 -> D=32, batch=2.
    n_samples, n_groups, batch = 8, 4, 2
    d_in = n_samples * n_groups

    key = jax.random.PRNGKey(0)
    k_x, k_p, k_big = jax.random.split(key, 3)
    x = jax.random.normal(k_x, (batch, d_in), dtype=jnp.float32)
    params = init_params(k_p, d_in)

    ref = reference_forward(x, params)

    # f32 path (tight check).
    out_f32 = jax.block_until_ready(
        discriminator_central(x, params, compute_dtype=jnp.float32))
    assert out_f32.shape == (batch, 1), out_f32.shape
    assert jnp.allclose(out_f32, ref, atol=1e-4, rtol=1e-4), (out_f32, ref)

    # bf16-operand path (default; looser tolerance vs f32 reference).
    out_bf16 = jax.block_until_ready(discriminator_central(x, params))
    assert out_bf16.shape == (batch, 1), out_bf16.shape
    assert jnp.allclose(out_bf16, ref, atol=1e-2, rtol=1e-2), (out_bf16, ref)

    # Multi-tile path: forces >= 2 batch tiles (and a ragged last tile) regardless of
    # TPU generation, exercising the streamed-x / batch-pad / lane-dense-output logic.
    big_b = 300
    xb = jax.random.normal(k_big, (big_b, d_in), dtype=jnp.float32)
    refb = reference_forward(xb, params)
    outb = jax.block_until_ready(
        discriminator_central(xb, params, compute_dtype=jnp.float32,
                              max_batch_tile=128))
    assert outb.shape == (big_b, 1), outb.shape
    assert jnp.allclose(outb, refb, atol=1e-4, rtol=1e-4), (outb, refb)

    print("KERNEL_OK")
</pallas_src>

<mosaic_0001>
module attributes {stable_mosaic.version = 11 : i64} {
  func.func @_disc_central_kernel(%arg0: i32, %arg1: memref<16x32xf32, #tpu.memory_space<vmem>>, %arg2: memref<32x256xf32, #tpu.memory_space<vmem>>, %arg3: memref<1x256xf32, #tpu.memory_space<vmem>>, %arg4: memref<256x64xf32, #tpu.memory_space<vmem>>, %arg5: memref<1x64xf32, #tpu.memory_space<vmem>>, %arg6: memref<8x64xf32, #tpu.memory_space<vmem>>, %arg7: memref<1x1xf32, #tpu.memory_space<smem>>, %arg8: memref<1x16xf32, #tpu.memory_space<vmem>>) attributes {dimension_semantics = [#tpu.dimension_semantics<parallel>], iteration_bounds = array<i64: 1>, scalar_prefetch = 0 : i64, scratch_operands = 0 : i64, tpu.core_type = #tpu.core_type<tc>, window_params = [{transform_indices = @transform_0, window_bounds = array<i64: 16, 32>}, {pipeline_mode = #tpu.pipeline_mode<synchronous>, transform_indices = @transform_1, window_bounds = array<i64: 32, 256>}, {pipeline_mode = #tpu.pipeline_mode<synchronous>, transform_indices = @transform_2, window_bounds = array<i64: 1, 256>}, {pipeline_mode = #tpu.pipeline_mode<synchronous>, transform_indices = @transform_3, window_bounds = array<i64: 256, 64>}, {pipeline_mode = #tpu.pipeline_mode<synchronous>, transform_indices = @transform_4, window_bounds = array<i64: 1, 64>}, {pipeline_mode = #tpu.pipeline_mode<synchronous>, transform_indices = @transform_5, window_bounds = array<i64: 8, 64>}, {transform_indices = @transform_6, window_bounds = array<i64: 1, 1>}, {transform_indices = @transform_7, window_bounds = array<i64: 1, 16>}]} {
    %c0 = arith.constant 0 : index
    %c0_0 = arith.constant 0 : index
    %0 = vector.load %arg1[%c0, %c0_0] : memref<16x32xf32, #tpu.memory_space<vmem>>, vector<16x32xf32>
    %c0_1 = arith.constant 0 : index
    %c0_2 = arith.constant 0 : index
    %1 = vector.load %arg2[%c0_1, %c0_2] : memref<32x256xf32, #tpu.memory_space<vmem>>, vector<32x256xf32>
    %cst = arith.constant dense<0.000000e+00> : vector<16x256xf32>
    %2 = tpu.matmul %0, %1, %cst {dimension_numbers = #tpu.dot_dimension_numbers<[1], [0], [0], [1], [0, 0, 1, 1], [], []>} : vector<16x32xf32>, vector<32x256xf32>, vector<16x256xf32> -> vector<16x256xf32>
    %c0_3 = arith.constant 0 : index
    %c0_4 = arith.constant 0 : index
    %3 = vector.load %arg3[%c0_3, %c0_4] : memref<1x256xf32, #tpu.memory_space<vmem>>, vector<1x256xf32>
    %4 = vector.broadcast %3 : vector<1x256xf32> to vector<16x256xf32>
    %5 = arith.addf %2, %4 : vector<16x256xf32>
    %cst_5 = arith.constant 0.000000e+00 : f32
    %6 = vector.broadcast %cst_5 : f32 to vector<16x256xf32>
    %7 = arith.cmpf ogt, %5, %6 : vector<16x256xf32>
    %cst_6 = arith.constant 2.000000e-01 : f32
    %8 = vector.broadcast %cst_6 : f32 to vector<16x256xf32>
    %9 = arith.mulf %8, %5 : vector<16x256xf32>
    %10 = arith.select %7, %5, %9 : vector<16x256xi1>, vector<16x256xf32>
    %c0_7 = arith.constant 0 : index
    %c0_8 = arith.constant 0 : index
    %11 = vector.load %arg4[%c0_7, %c0_8] : memref<256x64xf32, #tpu.memory_space<vmem>>, vector<256x64xf32>
    %cst_9 = arith.constant dense<0.000000e+00> : vector<16x64xf32>
    %12 = tpu.matmul %10, %11, %cst_9 {dimension_numbers = #tpu.dot_dimension_numbers<[1], [0], [0], [1], [0, 0, 1, 1], [], []>} : vector<16x256xf32>, vector<256x64xf32>, vector<16x64xf32> -> vector<16x64xf32>
    %c0_10 = arith.constant 0 : index
    %c0_11 = arith.constant 0 : index
    %13 = vector.load %arg5[%c0_10, %c0_11] : memref<1x64xf32, #tpu.memory_space<vmem>>, vector<1x64xf32>
    %14 = vector.broadcast %13 : vector<1x64xf32> to vector<16x64xf32>
    %15 = arith.addf %12, %14 : vector<16x64xf32>
    %cst_12 = arith.constant 0.000000e+00 : f32
    %16 = vector.broadcast %cst_12 : f32 to vector<16x64xf32>
    %17 = arith.cmpf ogt, %15, %16 : vector<16x64xf32>
    %cst_13 = arith.constant 2.000000e-01 : f32
    %18 = vector.broadcast %cst_13 : f32 to vector<16x64xf32>
    %19 = arith.mulf %18, %15 : vector<16x64xf32>
    %20 = arith.select %17, %15, %19 : vector<16x64xi1>, vector<16x64xf32>
    %c0_14 = arith.constant 0 : index
    %c0_15 = arith.constant 0 : index
    %21 = vector.load %arg6[%c0_14, %c0_15] : memref<8x64xf32, #tpu.memory_space<vmem>>, vector<8x64xf32>
    %cst_16 = arith.constant dense<0.000000e+00> : vector<8x16xf32>
    %22 = tpu.matmul %21, %20, %cst_16 {dimension_numbers = #tpu.dot_dimension_numbers<[1], [1], [0], [0], [0, 0, 1, 0], [], []>} : vector<8x64xf32>, vector<16x64xf32>, vector<8x16xf32> -> vector<8x16xf32>
    %23 = vector.extract_strided_slice %22 {offsets = [0, 0], sizes = [1, 16], strides = [1, 1]} : vector<8x16xf32> to vector<1x16xf32>
    %c0_17 = arith.constant 0 : index
    %c0_18 = arith.constant 0 : index
    %24 = memref.load %arg7[%c0_17, %c0_18] : memref<1x1xf32, #tpu.memory_space<smem>>
    %25 = vector.broadcast %24 : f32 to vector<1x16xf32>
    %26 = arith.addf %23, %25 : vector<1x16xf32>
    %27 = arith.negf %26 : vector<1x16xf32>
    %28 = math.exp %27 : vector<1x16xf32>
    %cst_19 = arith.constant 1.000000e+00 : f32
    %29 = vector.broadcast %cst_19 : f32 to vector<1x16xf32>
    %30 = arith.addf %29, %28 : vector<1x16xf32>
    %31 = arith.divf %29, %30 : vector<1x16xf32>
    %c0_20 = arith.constant 0 : index
    %c0_21 = arith.constant 0 : index
    %32 = vector.load %arg8[%c0_20, %c0_21] : memref<1x16xf32, #tpu.memory_space<vmem>>, vector<1x16xf32>
    tpu.vector_store %arg8[%c0_20, %c0_21], %31 {strides = array<i32>} : memref<1x16xf32, #tpu.memory_space<vmem>>, vector<1x16xf32>,
    return
  }
  func.func @transform_0(%arg0: i32) -> (i32, i32) {
    %c0_i32 = arith.constant 0 : i32
    %c0_i32_0 = arith.constant 0 : i32
    return %arg0, %c0_i32 : i32, i32
  }
  func.func @transform_1(%arg0: i32) -> (i32, i32) {
    %c0_i32 = arith.constant 0 : i32
    %c0_i32_0 = arith.constant 0 : i32
    %c0_i32_1 = arith.constant 0 : i32
    return %c0_i32, %c0_i32_0 : i32, i32
  }
  func.func @transform_2(%arg0: i32) -> (i32, i32) {
    %c0_i32 = arith.constant 0 : i32
    %c0_i32_0 = arith.constant 0 : i32
    %c0_i32_1 = arith.constant 0 : i32
    return %c0_i32, %c0_i32_0 : i32, i32
  }
  func.func @transform_3(%arg0: i32) -> (i32, i32) {
    %c0_i32 = arith.constant 0 : i32
    %c0_i32_0 = arith.constant 0 : i32
    %c0_i32_1 = arith.constant 0 : i32
    return %c0_i32, %c0_i32_0 : i32, i32
  }
  func.func @transform_4(%arg0: i32) -> (i32, i32) {
    %c0_i32 = arith.constant 0 : i32
    %c0_i32_0 = arith.constant 0 : i32
    %c0_i32_1 = arith.constant 0 : i32
    return %c0_i32, %c0_i32_0 : i32, i32
  }
  func.func @transform_5(%arg0: i32) -> (i32, i32) {
    %c0_i32 = arith.constant 0 : i32
    %c0_i32_0 = arith.constant 0 : i32
    %c0_i32_1 = arith.constant 0 : i32
    return %c0_i32, %c0_i32_0 : i32, i32
  }
  func.func @transform_6(%arg0: i32) -> (i32, i32) {
    %c0_i32 = arith.constant 0 : i32
    %c0_i32_0 = arith.constant 0 : i32
    %c0_i32_1 = arith.constant 0 : i32
    return %c0_i32, %c0_i32_0 : i32, i32
  }
  func.func @transform_7(%arg0: i32) -> (i32, i32) {
    %c0_i32 = arith.constant 0 : i32
    %c0_i32_0 = arith.constant 0 : i32
    return %c0_i32, %arg0 : i32, i32
  }
}

</mosaic_0001>

<llo_original>
// kernel: tpu_custom_call.1
$region0: #{tpu_custom_call.1}
  #allocation0 [shape = 'u32[]', space=smem, size = 0x4, offset = 0x4, fixed_abs, tag = 'smem constant byte address 0x4 - core index']
  #allocation1 [shape = 'u32[72,128]{1,0:T(1,128)}', space=vmem, size = 0x9000, scoped, tag = 'internal scratch']
  #allocation2 [shape = 'f32[1,1]{1,0:T(1,128)S(6)}', space=smem, size = 0x200, scoped, tag = 'scoped memory for tpu_custom_call.1']
  %s0 = inlined_call_operand.vmem [shape: f32[16,32], index: 0, kind: input, shape index: {}]
  %s1 = inlined_call_operand.vmem [shape: f32[32,256], index: 1, kind: input, shape index: {}]
  %s2 = inlined_call_operand.vmem [shape: f32[1,256], index: 2, kind: input, shape index: {}]
  %s3 = inlined_call_operand.vmem [shape: f32[256,64], index: 3, kind: input, shape index: {}]
  %s4 = inlined_call_operand.vmem [shape: f32[1,64], index: 4, kind: input, shape index: {}]
  %s5 = inlined_call_operand.vmem [shape: f32[8,64], index: 5, kind: input, shape index: {}]
  %s6 = inlined_call_operand.<no memory space> [shape: f32[1,1], index: 6, kind: input, shape index: {}]
  %s7 = inlined_call_operand.hbm [shape: f32[1,16], index: 7, kind: output, shape index: {}]
  %s8 = sld [smem:[#allocation0]]
  $region38: #{tpu_custom_call.1} parent=0
    _
  %s10 = ssub.s32 1, %s8
  %s11 = scalar_select 0, %s10, %s8
  %12 = sst [smem:[#allocation2]] %s6
  $region1: #{tpu_custom_call.1} parent=0
    #allocation3 [shape = 'u8[512]{0}', space=vmem, size = 0x400, scoped, tag = 'output window, operand 0, single buffered']
    #allocation4 [shape = 's32[1]{0}', space=sflag, size = 0x4, scoped, tag = 'scoped memory for tpu_custom_call.1']
    %13 = vsyncpa [#allocation4], 0
    // Predicated region
    $region2: #{tpu_custom_call.1} parent=1 // pred_check
      _
    $region3: #{tpu_custom_call.1} parent=1 // pred_check_branch
      %15 = sbr.rel (0) target = $region5
    $region4: #{tpu_custom_call.1} parent=1 // pred_region
      _
    $region5: #{tpu_custom_call.1} parent=1 // pred_fallthru
      _
    // Predicated region
    $region6: #{tpu_custom_call.1} parent=1 // pred_check
      _
    $region7: #{tpu_custom_call.1} parent=1 // pred_check_branch
      %17 = sbr.rel (0) target = $region9
    $region8: #{tpu_custom_call.1} parent=1 // pred_region
      _
    $region9: #{tpu_custom_call.1} parent=1 // pred_fallthru
      _
    // Predicated region
    $region10: #{tpu_custom_call.1} parent=1 // pred_check
      _
    $region11: #{tpu_custom_call.1} parent=1 // pred_check_branch
      %19 = sbr.rel (0) target = $region13
    $region12: #{tpu_custom_call.1} parent=1 // pred_region
      _
    $region13: #{tpu_custom_call.1} parent=1 // pred_fallthru
      _
    // Predicated region
    $region14: #{tpu_custom_call.1} parent=1 // pred_check
      _
    $region15: #{tpu_custom_call.1} parent=1 // pred_check_branch
      %21 = sbr.rel (0) target = $region17
    $region16: #{tpu_custom_call.1} parent=1 // pred_region
      _
    $region17: #{tpu_custom_call.1} parent=1 // pred_fallthru
      _
    // Predicated region
    $region18: #{tpu_custom_call.1} parent=1 // pred_check
      _
    $region19: #{tpu_custom_call.1} parent=1 // pred_check_branch
      %23 = sbr.rel (0) target = $region21
    $region20: #{tpu_custom_call.1} parent=1 // pred_region
      _
    $region21: #{tpu_custom_call.1} parent=1 // pred_fallthru
      _
    // Predicated region
    $region22: #{tpu_custom_call.1} parent=1 // pred_check
      _
    $region23: #{tpu_custom_call.1} parent=1 // pred_check_branch
      %25 = sbr.rel (0) target = $region25
    $region24: #{tpu_custom_call.1} parent=1 // pred_region
      _
    $region25: #{tpu_custom_call.1} parent=1 // pred_fallthru
      _
    // Predicated region
    $region26: #{tpu_custom_call.1} parent=1 // pred_check
      _
    $region27: #{tpu_custom_call.1} parent=1 // pred_check_branch
      %27 = sbr.rel (0) target = $region29
    $region28: #{tpu_custom_call.1} parent=1 // pred_region
      _
    $region29: #{tpu_custom_call.1} parent=1 // pred_fallthru
      _
    %v28 = vld [vmem:[%s0] sm:$0xff]
    %v29 = vld [vmem:[%s0 + $0x8] sm:$0xff]
    %v30 = vld [vmem:[%s1] sm:$0xff]
    %v31 = vld [vmem:[%s1 + $0x8] sm:$0xff]
    %v32 = vld [vmem:[%s1 + $0x10] sm:$0xff]
    %v33 = vld [vmem:[%s1 + $0x18] sm:$0xff]
    %v34 = vld [vmem:[%s1 + $0x20] sm:$0xff]
    %v35 = vld [vmem:[%s1 + $0x28] sm:$0xff]
    %v36 = vld [vmem:[%s1 + $0x30] sm:$0xff]
    %v37 = vld [vmem:[%s1 + $0x38] sm:$0xff]
    %v38 = vld [vmem:[%s2] sm:$0x3]
    %v40 = vperm.slane %v38, 0
    %v41 = vperm.slane %v38, 1
    %vm44 = vcmask 261120
    %v46 = vsel %vm44, %v28, 0
    %v49 = vsel %vm44, %v29, 0
    %51 = vmatpush.msra.mxu0 0.0
    %52 = vmatpush.msra.mxu0 0.0
    %53 = vmatpush.msra.mxu0 0.0
    %54 = vmatpush.msra.mxu0 0.0
    %55 = vmatpush.msra.mxu0 0.0
    %56 = vmatpush.msra.mxu0 0.0
    %57 = vmatpush.msra.mxu0 0.0
    %58 = vmatpush.msra.mxu0 0.0
    %59 = vmatpush.msra.mxu0 0.0
    %60 = vmatpush.msra.mxu0 0.0
    %61 = vmatpush.msra.mxu0 0.0
    %62 = vmatpush.msra.mxu0 0.0
    %63 = vmatpush.msra.mxu0 %v36
    %64 = vmatpush.msra.mxu0 %v34
    %65 = vmatpush.msra.mxu0 %v32
    %66 = vmatpush.msra.mxu0 %v30
    %67 = vmatmul.f32.gmra.mxu0 %v46
    %v68 = vpop.f32.mrf.mxu0
    %v69 = vadd.f32 %v40, %v68
    %70 = vmatmul.f32.gmra.mxu0 %v49
    %v71 = vpop.f32.mrf.mxu0
    %v72 = vadd.f32 %v40, %v71
    %73 = vdwg.mxu0
    %74 = vmatpush.msra.mxu0 0.0
    %75 = vmatpush.msra.mxu0 0.0
    %76 = vmatpush.msra.mxu0 0.0
    %77 = vmatpush.msra.mxu0 0.0
    %78 = vmatpush.msra.mxu0 0.0
    %79 = vmatpush.msra.mxu0 0.0
    %80 = vmatpush.msra.mxu0 0.0
    %81 = vmatpush.msra.mxu0 0.0
    %82 = vmatpush.msra.mxu0 0.0
    %83 = vmatpush.msra.mxu0 0.0
    %84 = vmatpush.msra.mxu0 0.0
    %85 = vmatpush.msra.mxu0 0.0
    %86 = vmatpush.msra.mxu0 %v37
    %87 = vmatpush.msra.mxu0 %v35
    %88 = vmatpush.msra.mxu0 %v33
    %89 = vmatpush.msra.mxu0 %v31
    %90 = vmatmul.f32.gmra.mxu0 %v46
    %v91 = vpop.f32.mrf.mxu0
    %v92 = vadd.f32 %v41, %v91
    %93 = vmatmul.f32.gmra.mxu0 %v49
    %v94 = vpop.f32.mrf.mxu0
    %v95 = vadd.f32 %v41, %v94
    %96 = vdwg.mxu0
    %vm97 = vcmp.gt.f32.partialorder %v69, 0.0
    %vm98 = vcmp.gt.f32.partialorder %v92, 0.0
    %vm99 = vcmp.gt.f32.partialorder %v72, 0.0
    %vm100 = vcmp.gt.f32.partialorder %v95, 0.0
    %v101 = vmul.f32 %v69, 0.2
    %v102 = vmul.f32 %v92, 0.2
    %v103 = vmul.f32 %v72, 0.2
    %v104 = vmul.f32 %v95, 0.2
    %v105 = vsel %vm97, %v69, %v101
    %v106 = vsel %vm98, %v92, %v102
    %v107 = vsel %vm99, %v72, %v103
    %v108 = vsel %vm100, %v95, %v104
    %v109 = vld [vmem:[%s3] sm:$0xff]
    %v110 = vld [vmem:[%s3 + $0x8] sm:$0xff]
    %v111 = vld [vmem:[%s3 + $0x10] sm:$0xff]
    %v112 = vld [vmem:[%s3 + $0x18] sm:$0xff]
    %v113 = vld [vmem:[%s3 + $0x20] sm:$0xff]
    %v114 = vld [vmem:[%s3 + $0x28] sm:$0xff]
    %v115 = vld [vmem:[%s3 + $0x30] sm:$0xff]
    %v116 = vld [vmem:[%s3 + $0x38] sm:$0xff]
    %v117 = vld [vmem:[%s3 + $0x40] sm:$0xff]
    %v118 = vld [vmem:[%s3 + $0x48] sm:$0xff]
    %v119 = vld [vmem:[%s3 + $0x50] sm:$0xff]
    %v120 = vld [vmem:[%s3 + $0x58] sm:$0xff]
    %v121 = vld [vmem:[%s3 + $0x60] sm:$0xff]
    %v122 = vld [vmem:[%s3 + $0x68] sm:$0xff]
    %v123 = vld [vmem:[%s3 + $0x70] sm:$0xff]
    %v124 = vld [vmem:[%s3 + $0x78] sm:$0xff]
    %v125 = vld [vmem:[%s3 + $0x80] sm:$0xff]
    %v126 = vld [vmem:[%s3 + $0x88] sm:$0xff]
    %v127 = vld [vmem:[%s3 + $0x90] sm:$0xff]
    %v128 = vld [vmem:[%s3 + $0x98] sm:$0xff]
    %v129 = vld [vmem:[%s3 + $0xa0] sm:$0xff]
    %v130 = vld [vmem:[%s3 + $0xa8] sm:$0xff]
    %v131 = vld [vmem:[%s3 + $0xb0] sm:$0xff]
    %v132 = vld [vmem:[%s3 + $0xb8] sm:$0xff]
    %v133 = vld [vmem:[%s3 + $0xc0] sm:$0xff]
    %v134 = vld [vmem:[%s3 + $0xc8] sm:$0xff]
    %v135 = vld [vmem:[%s3 + $0xd0] sm:$0xff]
    %v136 = vld [vmem:[%s3 + $0xd8] sm:$0xff]
    %v137 = vld [vmem:[%s3 + $0xe0] sm:$0xff]
    %v138 = vld [vmem:[%s3 + $0xe8] sm:$0xff]
    %v139 = vld [vmem:[%s3 + $0xf0] sm:$0xff]
    %v140 = vld [vmem:[%s3 + $0xf8] sm:$0xff]
    %v141 = vld [vmem:[%s4] sm:$0x1]
    %v143 = vperm.slane %v141, 0
    %145 = vmatpush.msra.mxu0 %v124
    %146 = vmatpush.msra.mxu0 %v123
    %147 = vmatpush.msra.mxu0 %v122
    %148 = vmatpush.msra.mxu0 %v121
    %149 = vmatpush.msra.mxu0 %v120
    %150 = vmatpush.msra.mxu0 %v119
    %151 = vmatpush.msra.mxu0 %v118
    %152 = vmatpush.msra.mxu0 %v117
    %153 = vmatpush.msra.mxu0 %v116
    %154 = vmatpush.msra.mxu0 %v115
    %155 = vmatpush.msra.mxu0 %v114
    %156 = vmatpush.msra.mxu0 %v113
    %157 = vmatpush.msra.mxu0 %v112
    %158 = vmatpush.msra.mxu0 %v111
    %159 = vmatpush.msra.mxu0 %v110
    %160 = vmatpush.msra.mxu0 %v109
    %161 = vmatmul.f32.gmra.mxu0 %v105
    %v162 = vpop.f32.mrf.mxu0
    %v163 = vadd.f32 %v143, %v162
    %164 = vmatmul.f32.gmra.mxu0 %v107
    %v165 = vpop.f32.mrf.mxu0
    %v166 = vadd.f32 %v143, %v165
    %167 = vdwg.mxu0
    %168 = vmatpush.msra.mxu0 %v140
    %169 = vmatpush.msra.mxu0 %v139
    %170 = vmatpush.msra.mxu0 %v138
    %171 = vmatpush.msra.mxu0 %v137
    %172 = vmatpush.msra.mxu0 %v136
    %173 = vmatpush.msra.mxu0 %v135
    %174 = vmatpush.msra.mxu0 %v134
    %175 = vmatpush.msra.mxu0 %v133
    %176 = vmatpush.msra.mxu0 %v132
    %177 = vmatpush.msra.mxu0 %v131
    %178 = vmatpush.msra.mxu0 %v130
    %179 = vmatpush.msra.mxu0 %v129
    %180 = vmatpush.msra.mxu0 %v128
    %181 = vmatpush.msra.mxu0 %v127
    %182 = vmatpush.msra.mxu0 %v126
    %183 = vmatpush.msra.mxu0 %v125
    %184 = vmatmul.f32.gmra.mxu0 %v106
    %v185 = vpop.f32.mrf.mxu0
    %v186 = vadd.f32 %v163, %v185
    %187 = vmatmul.f32.gmra.mxu0 %v108
    %v188 = vpop.f32.mrf.mxu0
    %v189 = vadd.f32 %v166, %v188
    %190 = vdwg.mxu0
    %vm191 = vcmp.gt.f32.partialorder %v186, 0.0
    %vm192 = vcmp.gt.f32.partialorder %v189, 0.0
    %v193 = vmul.f32 %v186, 0.2
    %v194 = vmul.f32 %v189, 0.2
    %v195 = vsel %vm191, %v186, %v193
    %v196 = vsel %vm192, %v189, %v194
    %v197 = vld [vmem:[%s5] sm:$0xff]
    %vm198 = vcmask 523264
    %v200 = vsel %vm198, %v197, 0
    %v203 = vsel %vm198, %v195, 0
    %v206 = vsel %vm198, %v196, 0
    %208 = vmatpush.xpose.msra.mxu0 0.0
    %209 = vmatpush.xpose.msra.mxu0 0.0
    %210 = vmatpush.xpose.msra.mxu0 0.0
    %211 = vmatpush.xpose.msra.mxu0 0.0
    %212 = vmatpush.xpose.msra.mxu0 0.0
    %213 = vmatpush.xpose.msra.mxu0 0.0
    %214 = vmatpush.xpose.msra.mxu0 0.0
    %215 = vmatpush.xpose.msra.mxu0 0.0
    %216 = vmatpush.xpose.msra.mxu0 0.0
    %217 = vmatpush.xpose.msra.mxu0 0.0
    %218 = vmatpush.xpose.msra.mxu0 0.0
    %219 = vmatpush.xpose.msra.mxu0 0.0
    %220 = vmatpush.xpose.msra.mxu0 0.0
    %221 = vmatpush.xpose.msra.mxu0 0.0
    %222 = vmatpush.xpose.msra.mxu0 %v206
    %223 = vmatpush.xpose.msra.mxu0 %v203
    %224 = vmatmul.f32.gmra.mxu0 %v200
    %v225 = vpop.f32.mrf.mxu0
    %v226 = vadd.f32 0.0, %v225
    %227 = vdwg.mxu0
    %s228 = sld [smem:[#allocation2]]
    %v229 = vstv %s228
    %v230 = vadd.f32 %v226, %v229
    %v231 = vxor.u32 %v230, 2147483648
    %v232 = vmul.f32 %v231, 1.442695
    %v233 = vpow.pop %v232
    %v234 = vadd.f32 %v233, 1.0
    %v235 = vrcp.pop %v234
    %v236 = vmul.f32 %v234, %v235
    %v237 = vsub.f32 1.0, %v236
    %v238 = vmul.f32 %v235, %v237
    %v239 = vadd.f32 %v235, %v238
    %vm240 = vweird.f32 %v234
    %vm241 = vweird.f32 %v235
    %vm242 = vmor %vm240, %vm241
    %v243 = vsel %vm242, %v235, %v239
    %v244 = vand.u32 2147483647, %v234
    %vm245 = vcmp.eq.f32.partialorder %v244, 8.507059e+37
    %v246 = vand.u32 %v234, 2147483648
    %v247 = vor.u32 1.1754944e-38, %v246
    %v248 = vsel %vm245, %v247, %v243
    %v249 = vmul.f32 1.0, %v248
    %vm250 = vcmask 122880
    %251 = vst.msk [vmem:[#allocation3] sm:$0x1] %vm250, %v249
    // Predicated region
    $region30: #{tpu_custom_call.1} parent=1 // pred_check
      _
    $region31: #{tpu_custom_call.1} parent=1 // pred_check_branch
      %253 = sbr.rel (0) target = $region33
    $region32: #{tpu_custom_call.1} parent=1 // pred_region
      %255 = vsyncadd [#allocation4], 0
      %s257 = sshll.u32 [#allocation3], 4
      %s258 = int_to_ptr.vmem [resolvable:$true] %s257
      %s259 = sshll.u32 %s7, 4
      %s260 = int_to_ptr.hbm [resolvable:$true] %s259
      %262 = dma.vmem_to_hbm [thread:$0]  %s258, 16, %s260, [#allocation4]
    $region33: #{tpu_custom_call.1} parent=1 // pred_fallthru
      _
    // Predicated region
    $region34: #{tpu_custom_call.1} parent=1 // pred_check
      _
    $region35: #{tpu_custom_call.1} parent=1 // pred_check_branch
      %264 = sbr.rel (0) target = $region37
    $region36: #{tpu_custom_call.1} parent=1 // pred_region
      %266 = dma.done [#allocation4], 16
    $region37: #{tpu_custom_call.1} parent=1 // pred_fallthru
      _
    %267 = vsyncpa [#allocation4], 1

</llo_original>
